<compile_context>
chip_gen: v7x
topology: tpu7x:2x2x1
jax: 0.10.0
libtpu: 0.0.40
codegen_flags: <defaults>
</compile_context>

<pallas_src>
import math

import jax
import jax.numpy as jnp
from jax.experimental import pallas as pl
from jax.experimental.pallas import tpu as pltpu


def make_positional_encoding(d_model: int, max_len: int = 5000,
                             dtype=jnp.float32) -> jnp.ndarray:
    """Sinusoidal PE buffer, identical to the PyTorch __init__ (built once)."""
    position = jnp.arange(0, max_len, dtype=jnp.float32)[:, None]          # (max_len, 1)
    div_term = jnp.exp(
        jnp.arange(0, d_model, 2, dtype=jnp.float32) * (-math.log(10000.0) / d_model)
    )
    pe = jnp.zeros((max_len, d_model), dtype=jnp.float32)
    pe = pe.at[:, 0::2].set(jnp.sin(position * div_term))
    pe = pe.at[:, 1::2].set(jnp.cos(position * div_term)[:, : d_model // 2])
    return pe.astype(dtype)


def _pe_add_kernel(x_ref, pe_ref, o_ref):
    # x_ref: (B, TS, LW); pe_ref: (1, TS, LW).  Broadcast add over batch (VPU).
    o_ref[...] = x_ref[...] + pe_ref[...]


def _choose_lane_width(S: int, D: int, max_lanes: int = 8192):
    """Lane width LW (multiple of 128 dividing S*D) for the (R, LW) row view."""
    L = S * D
    if D % 128 == 0 and D <= max_lanes:
        return D                                  # natural layout: rows == seq positions
    if L % 128 == 0:
        m = L // 128
        best = 1
        d = 1
        while d * d <= m:                         # largest divisor of m with 128*cand <= cap
            if m % d == 0:
                for cand in (d, m // d):
                    if cand > best and 128 * cand <= max_lanes:
                        best = cand
            d += 1
        return 128 * best
    return None                                   # no dense factorization; caller falls back


def _choose_row_tile(B: int, R: int, LW: int, itemsize: int,
                     target_tile_bytes: int) -> int:
    """Row tile TS: multiple of 8, sized by bytes, >= 2 grid steps when possible."""
    if R <= 8:
        return R                                  # full extent (always a legal block dim)
    ts = target_tile_bytes // max(B * LW * itemsize, 1)
    ts = max(8, (ts // 8) * 8)
    # keep at least 2 grid steps so v7x's two TensorCores both get work
    half = max(8, ((R // 2) // 8) * 8)
    ts = min(ts, half, R)
    # prefer a tile that divides R so every step is a full, unmasked block
    for cand in range(ts, 7, -8):
        if R % cand == 0:
            return cand
    return ts                                     # partial last block: masked but correct


def positional_encoding_forward(
    x: jnp.ndarray,
    pe: jnp.ndarray,
    *,
    target_tile_bytes: int = 2 * 1024 * 1024,     # ~2 MiB x blocks: ~85% HBM roofline,
    row_tile: int | None = None,                  # and double-buffered total < 16 MiB (v5e)
) -> jnp.ndarray:
    """x: [B, S, D]; pe: [max_len, D] (ideally already x.dtype). Returns x + pe[:S]."""
    B, S, D = x.shape
    pe_slice = pe[:S]
    if pe_slice.dtype != x.dtype:
        # Fallback cast; callers should build pe in the model dtype once instead.
        pe_slice = pe_slice.astype(x.dtype)

    itemsize = jnp.dtype(x.dtype).itemsize
    L = S * D
    lw = _choose_lane_width(S, D)

    if lw is None:
        # S*D not a multiple of 128: run the whole (small/ragged) array as one block.
        # TODO(synk): pad L up to a multiple of 1024 and tile if this path ever matters.
        return pl.pallas_call(
            _pe_add_kernel,
            out_shape=jax.ShapeDtypeStruct((B, S, D), x.dtype),
            grid=(1,),
            in_specs=[
                pl.BlockSpec((B, S, D), lambda i: (0, 0, 0)),
                pl.BlockSpec((1, S, D), lambda i: (0, 0, 0)),
            ],
            out_specs=pl.BlockSpec((B, S, D), lambda i: (0, 0, 0)),
        )(x, pe_slice.reshape(1, S, D))

    R = L // lw
    ts = row_tile if row_tile is not None else _choose_row_tile(
        B, R, lw, itemsize, target_tile_bytes
    )

    # Row-major contiguous reshapes: free relayouts, lane dim stays dense.
    x3d = x.reshape(B, R, lw)
    pe3d = pe_slice.reshape(1, R, lw)

    grid = (pl.cdiv(R, ts),)
    cost = pl.CostEstimate(
        flops=B * L,
        transcendentals=0,
        bytes_accessed=(2 * B * L + L) * itemsize,
    )

    out3d = pl.pallas_call(
        _pe_add_kernel,
        out_shape=jax.ShapeDtypeStruct((B, R, lw), x.dtype),
        grid=grid,
        in_specs=[
            pl.BlockSpec((B, ts, lw), lambda r: (0, r, 0)),   # x row tile (all batch rows)
            pl.BlockSpec((1, ts, lw), lambda r: (0, r, 0)),   # matching pe row tile
        ],
        out_specs=pl.BlockSpec((B, ts, lw), lambda r: (0, r, 0)),
        compiler_params=pltpu.CompilerParams(
            dimension_semantics=("parallel",),                # shards steps across v7x TCs
        ),
        cost_estimate=cost,
    )(x3d, pe3d)
    return out3d.reshape(B, S, D)


if __name__ == "__main__":
    key = jax.random.PRNGKey(0)
    k1, k2, k3 = jax.random.split(key, 3)

    # 1) The module's canonical small shape: [batch=2, seq_len=8, d_model=32].
    B, S, D = 2, 8, 32
    x = jax.random.normal(k1, (B, S, D), dtype=jnp.float32)
    pe = make_positional_encoding(D, max_len=64, dtype=x.dtype)
    out = jax.block_until_ready(positional_encoding_forward(x, pe))
    ref = x + pe[:S][None, :, :]
    assert out.shape == (B, S, D)
    assert jnp.allclose(out, ref, atol=1e-6, rtol=1e-6)

    # 2) d_model a multiple of 128: natural (B, TS, D) tiling over the sequence
    #    axis; row_tile=8 exercises a multi-step grid (4 steps).
    B2, S2, D2 = 2, 32, 128
    x2 = jax.random.normal(k2, (B2, S2, D2), dtype=jnp.float32)
    pe2 = make_positional_encoding(D2, max_len=64, dtype=x2.dtype)
    out2 = jax.block_until_ready(positional_encoding_forward(x2, pe2, row_tile=8))
    ref2 = x2 + pe2[:S2][None, :, :]
    assert jnp.allclose(out2, ref2, atol=1e-6, rtol=1e-6)

    # 3) Ragged case where S*D is not a multiple of 128: whole-array fallback path.
    B3, S3, D3 = 2, 5, 12
    x3 = jax.random.normal(k3, (B3, S3, D3), dtype=jnp.float32)
    pe3 = make_positional_encoding(D3, max_len=16, dtype=x3.dtype)
    out3 = jax.block_until_ready(positional_encoding_forward(x3, pe3))
    ref3 = x3 + pe3[:S3][None, :, :]
    assert jnp.allclose(out3, ref3, atol=1e-6, rtol=1e-6)

    print("KERNEL_OK")
</pallas_src>

<mosaic_0001>
module attributes {stable_mosaic.version = 11 : i64} {
  func.func @_pe_add_kernel(%arg0: i32, %arg1: memref<2x1x256xf32, #tpu.memory_space<vmem>>, %arg2: memref<1x1x256xf32, #tpu.memory_space<vmem>>, %arg3: memref<2x1x256xf32, #tpu.memory_space<vmem>>) attributes {dimension_semantics = [#tpu.dimension_semantics<parallel>], iteration_bounds = array<i64: 1>, scalar_prefetch = 0 : i64, scratch_operands = 0 : i64, tpu.core_type = #tpu.core_type<tc>, window_params = [{transform_indices = @transform_0, window_bounds = array<i64: 2, 1, 256>}, {transform_indices = @transform_1, window_bounds = array<i64: 1, 1, 256>}, {transform_indices = @transform_2, window_bounds = array<i64: 2, 1, 256>}]} {
    %c0 = arith.constant 0 : index
    %c0_0 = arith.constant 0 : index
    %c0_1 = arith.constant 0 : index
    %0 = vector.load %arg1[%c0, %c0_0, %c0_1] : memref<2x1x256xf32, #tpu.memory_space<vmem>>, vector<2x1x256xf32>
    %c0_2 = arith.constant 0 : index
    %c0_3 = arith.constant 0 : index
    %c0_4 = arith.constant 0 : index
    %1 = vector.load %arg2[%c0_2, %c0_3, %c0_4] : memref<1x1x256xf32, #tpu.memory_space<vmem>>, vector<1x1x256xf32>
    %2 = vector.broadcast %1 : vector<1x1x256xf32> to vector<2x1x256xf32>
    %3 = arith.addf %0, %2 : vector<2x1x256xf32>
    %c0_5 = arith.constant 0 : index
    %c0_6 = arith.constant 0 : index
    %c0_7 = arith.constant 0 : index
    %4 = vector.load %arg3[%c0_5, %c0_6, %c0_7] : memref<2x1x256xf32, #tpu.memory_space<vmem>>, vector<2x1x256xf32>
    tpu.vector_store %arg3[%c0_5, %c0_6, %c0_7], %3 {strides = array<i32>} : memref<2x1x256xf32, #tpu.memory_space<vmem>>, vector<2x1x256xf32>,
    return
  }
  func.func @transform_0(%arg0: i32) -> (i32, i32, i32) {
    %c0_i32 = arith.constant 0 : i32
    %c0_i32_0 = arith.constant 0 : i32
    %c0_i32_1 = arith.constant 0 : i32
    return %c0_i32, %arg0, %c0_i32_0 : i32, i32, i32
  }
  func.func @transform_1(%arg0: i32) -> (i32, i32, i32) {
    %c0_i32 = arith.constant 0 : i32
    %c0_i32_0 = arith.constant 0 : i32
    %c0_i32_1 = arith.constant 0 : i32
    return %c0_i32, %arg0, %c0_i32_0 : i32, i32, i32
  }
  func.func @transform_2(%arg0: i32) -> (i32, i32, i32) {
    %c0_i32 = arith.constant 0 : i32
    %c0_i32_0 = arith.constant 0 : i32
    %c0_i32_1 = arith.constant 0 : i32
    return %c0_i32, %arg0, %c0_i32_0 : i32, i32, i32
  }
}

</mosaic_0001>

<llo_original>
// kernel: tpu_custom_call.1
$region0: #{tpu_custom_call.1}
  #allocation0 [shape = 'u32[]', space=smem, size = 0x4, offset = 0x4, fixed_abs, tag = 'smem constant byte address 0x4 - core index']
  #allocation1 [shape = 'u32[144,128]{1,0:T(1,128)}', space=vmem, size = 0x12000, scoped, tag = 'internal scratch']
  %s0 = inlined_call_operand.hbm [shape: f32[2,1,256], index: 0, kind: input, shape index: {}]
  %s1 = inlined_call_operand.vmem [shape: f32[1,1,256], index: 1, kind: input, shape index: {}]
  %s2 = inlined_call_operand.hbm [shape: f32[2,1,256], index: 2, kind: output, shape index: {}]
  %s3 = sld [smem:[#allocation0]]
  $region22: #{tpu_custom_call.1} parent=0
    _
  %s5 = ssub.s32 1, %s3
  %s6 = scalar_select 0, %s5, %s3
  $region1: #{tpu_custom_call.1} parent=0
    #allocation2 [shape = 'u8[2048]{0}', space=vmem, size = 0x800, scoped, tag = 'input window, operand 0, single buffered']
    #allocation3 [shape = 's32[1]{0}', space=sflag, size = 0x4, scoped, tag = 'scoped memory for tpu_custom_call.1']
    #allocation4 [shape = 's32[1]{0}', space=sflag, size = 0x4, scoped, tag = 'scoped memory for tpu_custom_call.1']
    #allocation5 [shape = 'u8[2048]{0}', space=vmem, size = 0x800, scoped, tag = 'output window, operand 0, single buffered']
    %7 = vsyncpa [#allocation3], 0
    %8 = vsyncpa [#allocation4], 0
    // Predicated region
    $region2: #{tpu_custom_call.1} parent=1 // pred_check
      _
    $region3: #{tpu_custom_call.1} parent=1 // pred_check_branch
      %10 = sbr.rel (0) target = $region5
    $region4: #{tpu_custom_call.1} parent=1 // pred_region
      %s12 = ssub.s32 64, 64
      %13 = vsyncadd [#allocation3], %s12
      %s14 = sshll.u32 [#allocation2], 4
      %s15 = int_to_ptr.vmem [resolvable:$true] %s14
      %20 = dma.hbm_to_vmem [thread:$0]  %s0, 64, %s15, [#allocation3], 32, 32, 2
    $region5: #{tpu_custom_call.1} parent=1 // pred_fallthru
      _
    // Predicated region
    $region6: #{tpu_custom_call.1} parent=1 // pred_check
      _
    $region7: #{tpu_custom_call.1} parent=1 // pred_check_branch
      %22 = sbr.rel (0) target = $region9
    $region8: #{tpu_custom_call.1} parent=1 // pred_region
      _
    $region9: #{tpu_custom_call.1} parent=1 // pred_fallthru
      _
    // Predicated region
    $region10: #{tpu_custom_call.1} parent=1 // pred_check
      _
    $region11: #{tpu_custom_call.1} parent=1 // pred_check_branch
      %24 = sbr.rel (0) target = $region13
    $region12: #{tpu_custom_call.1} parent=1 // pred_region
      %25 = dma.done [#allocation3], 64
    $region13: #{tpu_custom_call.1} parent=1 // pred_fallthru
      _
    %v26 = vld [vmem:[#allocation2] sm:$0x3]
    %v27 = vld [vmem:[#allocation2 + $0x2] sm:$0x3]
    %v28 = vld [vmem:[%s1] sm:$0x3]
    %v29 = vadd.f32 %v26, %v28
    %v30 = vadd.f32 %v27, %v28
    %v31 = vlaneseq
    %vm32 = vcmp.ge.s32.totalorder %v31, 0
    %vm33 = vcmp.lt.s32.totalorder %v31, 256
    %vm34 = vmand %vm32, %vm33
    %35 = vst.msk [vmem:[#allocation5] sm:$0x3] %vm34, %v29
    %36 = vst.msk [vmem:[#allocation5 + $0x2] sm:$0x3] %vm34, %v30
    // Predicated region
    $region14: #{tpu_custom_call.1} parent=1 // pred_check
      _
    $region15: #{tpu_custom_call.1} parent=1 // pred_check_branch
      %38 = sbr.rel (0) target = $region17
    $region16: #{tpu_custom_call.1} parent=1 // pred_region
      %s40 = ssub.s32 64, 64
      %41 = vsyncadd [#allocation4], %s40
      %s42 = sshll.u32 [#allocation5], 4
      %s43 = int_to_ptr.vmem [resolvable:$true] %s42
      %48 = dma.vmem_to_hbm [thread:$0]  %s43, 64, %s2, [#allocation4], 32, 32, 2
    $region17: #{tpu_custom_call.1} parent=1 // pred_fallthru
      _
    // Predicated region
    $region18: #{tpu_custom_call.1} parent=1 // pred_check
      _
    $region19: #{tpu_custom_call.1} parent=1 // pred_check_branch
      %50 = sbr.rel (0) target = $region21
    $region20: #{tpu_custom_call.1} parent=1 // pred_region
      %51 = dma.done [#allocation4], 64
    $region21: #{tpu_custom_call.1} parent=1 // pred_fallthru
      _
    %52 = vsyncpa [#allocation3], 1
    %53 = vsyncpa [#allocation4], 1

</llo_original>
